<compile_context>
chip_gen: v7x
topology: tpu7x:2x2x1
jax: 0.10.0
libtpu: 0.0.40
codegen_flags: <defaults>
</compile_context>

<pallas_src>
import functools

import jax
import jax.numpy as jnp
from jax import lax
from jax.experimental import pallas as pl
from jax.experimental.pallas import tpu as pltpu


def _mean_shift_kernel(x_ref, traj_ref, *, delta, eta, ms_iter):
    """All ms_iter mean-shift iterations in one kernel invocation.

    x_ref:    (D, N) input features (VMEM)
    traj_ref: (ms_iter, D, N) output trajectory (VMEM)
    """
    X0 = x_ref[...].astype(jnp.float32)
    _, N = X0.shape

    # Hoisted constant: 8 identical "ones" rows so the LHS is sublane-native.
    ones8 = jnp.ones((8, N), jnp.float32)

    def body(i, X):
        # Fold delta into the Gram operand: (delta*X)^T(delta*X) == delta^2 * X^T X.
        Xs = delta * X                                                    # (D, N)

        # S = Xs^T Xs -- contract dim 0 of both operands (no explicit transpose).
        S = lax.dot_general(
            Xs, Xs,
            dimension_numbers=(((0,), (0,)), ((), ())),
            preferred_element_type=jnp.float32,
        )                                                                 # (N, N)

        K = jnp.exp(S)                                                    # (N, N)

        # Column sums d_j = sum_i K[i, j] on the MXU (ones @ K), not a
        # cross-sublane reduce on the serial path.
        d8 = lax.dot_general(
            ones8, K,
            dimension_numbers=(((1,), (0,)), ((), ())),
            preferred_element_type=jnp.float32,
        )                                                                 # (8, N), identical rows
        d = d8[0:1, :]                                                    # (1, N)

        # 1/d on the EUP (approx vrcp) + one Newton step -> ~f32 accuracy.
        r = pl.reciprocal(d, approx=True)
        inv_d = r * (2.0 - d * r)                                         # (1, N)

        # P = (1-eta)*I + eta*K*D_inv  ==>  X @ P = (1-eta)*X + eta*(X @ K)*inv_d.
        XK = jnp.dot(X, K, preferred_element_type=jnp.float32)            # (D, N) MXU
        new_X = (1.0 - eta) * X + eta * (XK * inv_d)

        # L2-normalize each column (norm over dim 0) via rsqrt on the EUP.
        sumsq = jnp.sum(new_X * new_X, axis=0, keepdims=True)             # (1, N)
        new_X = new_X * lax.rsqrt(sumsq)

        traj_ref[i] = new_X.astype(traj_ref.dtype)
        return new_X

    lax.fori_loop(0, ms_iter, body, X0, unroll=True)


def mean_shift_forward(z, *, delta, eta, ms_iter):
    """Pallas implementation of Mean_Shift.forward.

    z: (D, N) float32.  Returns (N, ms_iter, D) float32.
    """
    D, N = z.shape
    kernel = functools.partial(
        _mean_shift_kernel, delta=float(delta), eta=float(eta), ms_iter=int(ms_iter)
    )

    trajects = pl.pallas_call(
        kernel,
        out_shape=jax.ShapeDtypeStruct((ms_iter, D, N), jnp.float32),
        in_specs=[pl.BlockSpec(memory_space=pltpu.MemorySpace.VMEM)],
        out_specs=pl.BlockSpec(memory_space=pltpu.MemorySpace.VMEM),
    )(z)

    # (ms_iter, D, N) -> permute(2, 0, 1) -> (N, ms_iter, D); tiny, left to XLA.
    return jnp.transpose(trajects, (2, 0, 1))


# ------------------- pure-JAX reference (torch-faithful, HIGHEST precision) -------------------
def _mean_shift_once_ref(X, delta, eta):
    hp = lax.Precision.HIGHEST
    D, N = X.shape
    S = jnp.dot(X.T, X, precision=hp)
    K = jnp.exp(delta * delta * S)
    d = jnp.dot(K.T, jnp.ones((N, 1), jnp.float32), precision=hp)
    q = 1.0 / d
    D_inv = jnp.diagflat(q)
    P = (1.0 - eta) * jnp.eye(N, dtype=jnp.float32) + eta * jnp.dot(K, D_inv, precision=hp)
    new_X = jnp.dot(X, P, precision=hp)
    norm = jnp.linalg.norm(new_X, ord=2, axis=0, keepdims=True)
    return new_X / norm


def _mean_shift_forward_ref(z, delta, eta, ms_iter):
    outs = []
    X = z
    for _ in range(ms_iter):
        X = _mean_shift_once_ref(X, delta, eta)
        outs.append(X)
    traj = jnp.stack(outs, axis=0)          # (ms_iter, D, N)
    return jnp.transpose(traj, (2, 0, 1))   # (N, ms_iter, D)


if __name__ == "__main__":
    delta, eta, ms_iter = 1.0, 0.5, 3
    D, N = 32, 128  # feature dim, number of points

    key = jax.random.PRNGKey(0)
    z = jax.random.normal(key, (D, N), dtype=jnp.float32)
    # unit-normalize columns (typical embedding input for mean-shift clustering)
    z = z / jnp.linalg.norm(z, axis=0, keepdims=True)

    fwd = jax.jit(functools.partial(mean_shift_forward, delta=delta, eta=eta, ms_iter=ms_iter))
    out = fwd(z)
    out = jax.block_until_ready(out)

    ref = _mean_shift_forward_ref(z, delta, eta, ms_iter)
    assert out.shape == (N, ms_iter, D), out.shape
    max_err = float(jnp.max(jnp.abs(out - ref)))
    assert jnp.allclose(out, ref, atol=1e-4, rtol=1e-4), max_err

    print("KERNEL_OK")
</pallas_src>

<mosaic_0001>
module attributes {stable_mosaic.version = 11 : i64} {
  func.func @_mean_shift_kernel(%arg0: memref<32x128xf32, #tpu.memory_space<vmem>>, %arg1: memref<3x32x128xf32, #tpu.memory_space<vmem>>) attributes {dimension_semantics = [], scalar_prefetch = 0 : i64, scratch_operands = 0 : i64, tpu.core_type = #tpu.core_type<tc>} {
    %c0 = arith.constant 0 : index
    %c0_0 = arith.constant 0 : index
    %0 = vector.load %arg0[%c0, %c0_0] : memref<32x128xf32, #tpu.memory_space<vmem>>, vector<32x128xf32>
    %cst = arith.constant 1.000000e+00 : f32
    %1 = vector.broadcast %cst : f32 to vector<8x128xf32>
    %c0_i32 = arith.constant 0 : i32
    %cst_1 = arith.constant 1.000000e+00 : f32
    %2 = vector.broadcast %cst_1 : f32 to vector<32x128xf32>
    %3 = arith.mulf %2, %0 : vector<32x128xf32>
    %cst_2 = arith.constant dense<0.000000e+00> : vector<128x128xf32>
    %4 = tpu.matmul %3, %3, %cst_2 {dimension_numbers = #tpu.dot_dimension_numbers<[0], [0], [1], [1], [0, 1, 1, 1], [], []>} : vector<32x128xf32>, vector<32x128xf32>, vector<128x128xf32> -> vector<128x128xf32>
    %5 = math.exp %4 : vector<128x128xf32>
    %cst_3 = arith.constant dense<0.000000e+00> : vector<8x128xf32>
    %6 = tpu.matmul %1, %5, %cst_3 {dimension_numbers = #tpu.dot_dimension_numbers<[1], [0], [0], [1], [0, 0, 1, 1], [], []>} : vector<8x128xf32>, vector<128x128xf32>, vector<8x128xf32> -> vector<8x128xf32>
    %7 = vector.extract_strided_slice %6 {offsets = [0, 0], sizes = [1, 128], strides = [1, 1]} : vector<8x128xf32> to vector<1x128xf32>
    %8 = tpu.reciprocal %7 {approx = true} : vector<1x128xf32> -> vector<1x128xf32>
    %9 = arith.mulf %7, %8 : vector<1x128xf32>
    %cst_4 = arith.constant 2.000000e+00 : f32
    %10 = vector.broadcast %cst_4 : f32 to vector<1x128xf32>
    %11 = arith.subf %10, %9 : vector<1x128xf32>
    %12 = arith.mulf %8, %11 : vector<1x128xf32>
    %cst_5 = arith.constant dense<0.000000e+00> : vector<32x128xf32>
    %13 = tpu.matmul %0, %5, %cst_5 {dimension_numbers = #tpu.dot_dimension_numbers<[1], [0], [0], [1], [0, 0, 1, 1], [], []>} : vector<32x128xf32>, vector<128x128xf32>, vector<32x128xf32> -> vector<32x128xf32>
    %cst_6 = arith.constant 5.000000e-01 : f32
    %14 = vector.broadcast %cst_6 : f32 to vector<32x128xf32>
    %15 = arith.mulf %14, %0 : vector<32x128xf32>
    %16 = vector.broadcast %12 : vector<1x128xf32> to vector<32x128xf32>
    %17 = arith.mulf %13, %16 : vector<32x128xf32>
    %cst_7 = arith.constant 5.000000e-01 : f32
    %18 = vector.broadcast %cst_7 : f32 to vector<32x128xf32>
    %19 = arith.mulf %18, %17 : vector<32x128xf32>
    %20 = arith.addf %15, %19 : vector<32x128xf32>
    %21 = arith.mulf %20, %20 : vector<32x128xf32>
    %cst_8 = arith.constant dense<0.000000e+00> : vector<128xf32>
    %22 = vector.multi_reduction <add>, %21, %cst_8 [0] : vector<32x128xf32> to vector<128xf32>
    %23 = vector.shape_cast %22 : vector<128xf32> to vector<1x128xf32>
    %24 = math.rsqrt %23 : vector<1x128xf32>
    %25 = vector.broadcast %24 : vector<1x128xf32> to vector<32x128xf32>
    %26 = arith.mulf %20, %25 : vector<32x128xf32>
    %27 = arith.index_cast %c0_i32 : i32 to index
    %c0_9 = arith.constant 0 : index
    %c0_10 = arith.constant 0 : index
    %28 = vector.load %arg1[%27, %c0_9, %c0_10] : memref<3x32x128xf32, #tpu.memory_space<vmem>>, vector<1x32x128xf32>
    %29 = vector.shape_cast %28 : vector<1x32x128xf32> to vector<32x128xf32>
    %30 = vector.shape_cast %26 : vector<32x128xf32> to vector<1x32x128xf32>
    tpu.vector_store %arg1[%27, %c0_9, %c0_10], %30 {strides = array<i32>} : memref<3x32x128xf32, #tpu.memory_space<vmem>>, vector<1x32x128xf32>,
    %c1_i32 = arith.constant 1 : i32
    %cst_11 = arith.constant 1.000000e+00 : f32
    %31 = vector.broadcast %cst_11 : f32 to vector<32x128xf32>
    %32 = arith.mulf %31, %26 : vector<32x128xf32>
    %cst_12 = arith.constant dense<0.000000e+00> : vector<128x128xf32>
    %33 = tpu.matmul %32, %32, %cst_12 {dimension_numbers = #tpu.dot_dimension_numbers<[0], [0], [1], [1], [0, 1, 1, 1], [], []>} : vector<32x128xf32>, vector<32x128xf32>, vector<128x128xf32> -> vector<128x128xf32>
    %34 = math.exp %33 : vector<128x128xf32>
    %cst_13 = arith.constant dense<0.000000e+00> : vector<8x128xf32>
    %35 = tpu.matmul %1, %34, %cst_13 {dimension_numbers = #tpu.dot_dimension_numbers<[1], [0], [0], [1], [0, 0, 1, 1], [], []>} : vector<8x128xf32>, vector<128x128xf32>, vector<8x128xf32> -> vector<8x128xf32>
    %36 = vector.extract_strided_slice %35 {offsets = [0, 0], sizes = [1, 128], strides = [1, 1]} : vector<8x128xf32> to vector<1x128xf32>
    %37 = tpu.reciprocal %36 {approx = true} : vector<1x128xf32> -> vector<1x128xf32>
    %38 = arith.mulf %36, %37 : vector<1x128xf32>
    %cst_14 = arith.constant 2.000000e+00 : f32
    %39 = vector.broadcast %cst_14 : f32 to vector<1x128xf32>
    %40 = arith.subf %39, %38 : vector<1x128xf32>
    %41 = arith.mulf %37, %40 : vector<1x128xf32>
    %cst_15 = arith.constant dense<0.000000e+00> : vector<32x128xf32>
    %42 = tpu.matmul %26, %34, %cst_15 {dimension_numbers = #tpu.dot_dimension_numbers<[1], [0], [0], [1], [0, 0, 1, 1], [], []>} : vector<32x128xf32>, vector<128x128xf32>, vector<32x128xf32> -> vector<32x128xf32>
    %cst_16 = arith.constant 5.000000e-01 : f32
    %43 = vector.broadcast %cst_16 : f32 to vector<32x128xf32>
    %44 = arith.mulf %43, %26 : vector<32x128xf32>
    %45 = vector.broadcast %41 : vector<1x128xf32> to vector<32x128xf32>
    %46 = arith.mulf %42, %45 : vector<32x128xf32>
    %cst_17 = arith.constant 5.000000e-01 : f32
    %47 = vector.broadcast %cst_17 : f32 to vector<32x128xf32>
    %48 = arith.mulf %47, %46 : vector<32x128xf32>
    %49 = arith.addf %44, %48 : vector<32x128xf32>
    %50 = arith.mulf %49, %49 : vector<32x128xf32>
    %cst_18 = arith.constant dense<0.000000e+00> : vector<128xf32>
    %51 = vector.multi_reduction <add>, %50, %cst_18 [0] : vector<32x128xf32> to vector<128xf32>
    %52 = vector.shape_cast %51 : vector<128xf32> to vector<1x128xf32>
    %53 = math.rsqrt %52 : vector<1x128xf32>
    %54 = vector.broadcast %53 : vector<1x128xf32> to vector<32x128xf32>
    %55 = arith.mulf %49, %54 : vector<32x128xf32>
    %56 = arith.index_cast %c1_i32 : i32 to index
    %c0_19 = arith.constant 0 : index
    %c0_20 = arith.constant 0 : index
    %57 = vector.load %arg1[%56, %c0_19, %c0_20] : memref<3x32x128xf32, #tpu.memory_space<vmem>>, vector<1x32x128xf32>
    %58 = vector.shape_cast %57 : vector<1x32x128xf32> to vector<32x128xf32>
    %59 = vector.shape_cast %55 : vector<32x128xf32> to vector<1x32x128xf32>
    tpu.vector_store %arg1[%56, %c0_19, %c0_20], %59 {strides = array<i32>} : memref<3x32x128xf32, #tpu.memory_space<vmem>>, vector<1x32x128xf32>,
    %c2_i32 = arith.constant 2 : i32
    %cst_21 = arith.constant 1.000000e+00 : f32
    %60 = vector.broadcast %cst_21 : f32 to vector<32x128xf32>
    %61 = arith.mulf %60, %55 : vector<32x128xf32>
    %cst_22 = arith.constant dense<0.000000e+00> : vector<128x128xf32>
    %62 = tpu.matmul %61, %61, %cst_22 {dimension_numbers = #tpu.dot_dimension_numbers<[0], [0], [1], [1], [0, 1, 1, 1], [], []>} : vector<32x128xf32>, vector<32x128xf32>, vector<128x128xf32> -> vector<128x128xf32>
    %63 = math.exp %62 : vector<128x128xf32>
    %cst_23 = arith.constant dense<0.000000e+00> : vector<8x128xf32>
    %64 = tpu.matmul %1, %63, %cst_23 {dimension_numbers = #tpu.dot_dimension_numbers<[1], [0], [0], [1], [0, 0, 1, 1], [], []>} : vector<8x128xf32>, vector<128x128xf32>, vector<8x128xf32> -> vector<8x128xf32>
    %65 = vector.extract_strided_slice %64 {offsets = [0, 0], sizes = [1, 128], strides = [1, 1]} : vector<8x128xf32> to vector<1x128xf32>
    %66 = tpu.reciprocal %65 {approx = true} : vector<1x128xf32> -> vector<1x128xf32>
    %67 = arith.mulf %65, %66 : vector<1x128xf32>
    %cst_24 = arith.constant 2.000000e+00 : f32
    %68 = vector.broadcast %cst_24 : f32 to vector<1x128xf32>
    %69 = arith.subf %68, %67 : vector<1x128xf32>
    %70 = arith.mulf %66, %69 : vector<1x128xf32>
    %cst_25 = arith.constant dense<0.000000e+00> : vector<32x128xf32>
    %71 = tpu.matmul %55, %63, %cst_25 {dimension_numbers = #tpu.dot_dimension_numbers<[1], [0], [0], [1], [0, 0, 1, 1], [], []>} : vector<32x128xf32>, vector<128x128xf32>, vector<32x128xf32> -> vector<32x128xf32>
    %cst_26 = arith.constant 5.000000e-01 : f32
    %72 = vector.broadcast %cst_26 : f32 to vector<32x128xf32>
    %73 = arith.mulf %72, %55 : vector<32x128xf32>
    %74 = vector.broadcast %70 : vector<1x128xf32> to vector<32x128xf32>
    %75 = arith.mulf %71, %74 : vector<32x128xf32>
    %cst_27 = arith.constant 5.000000e-01 : f32
    %76 = vector.broadcast %cst_27 : f32 to vector<32x128xf32>
    %77 = arith.mulf %76, %75 : vector<32x128xf32>
    %78 = arith.addf %73, %77 : vector<32x128xf32>
    %79 = arith.mulf %78, %78 : vector<32x128xf32>
    %cst_28 = arith.constant dense<0.000000e+00> : vector<128xf32>
    %80 = vector.multi_reduction <add>, %79, %cst_28 [0] : vector<32x128xf32> to vector<128xf32>
    %81 = vector.shape_cast %80 : vector<128xf32> to vector<1x128xf32>
    %82 = math.rsqrt %81 : vector<1x128xf32>
    %83 = vector.broadcast %82 : vector<1x128xf32> to vector<32x128xf32>
    %84 = arith.mulf %78, %83 : vector<32x128xf32>
    %85 = arith.index_cast %c2_i32 : i32 to index
    %c0_29 = arith.constant 0 : index
    %c0_30 = arith.constant 0 : index
    %86 = vector.load %arg1[%85, %c0_29, %c0_30] : memref<3x32x128xf32, #tpu.memory_space<vmem>>, vector<1x32x128xf32>
    %87 = vector.shape_cast %86 : vector<1x32x128xf32> to vector<32x128xf32>
    %88 = vector.shape_cast %84 : vector<32x128xf32> to vector<1x32x128xf32>
    tpu.vector_store %arg1[%85, %c0_29, %c0_30], %88 {strides = array<i32>} : memref<3x32x128xf32, #tpu.memory_space<vmem>>, vector<1x32x128xf32>,
    %c3_i32 = arith.constant 3 : i32
    return
  }
}

</mosaic_0001>

<llo_original>
// kernel: mean_shift_forward.1
$region0: #{mean_shift_forward.1}
  #allocation0 [shape = 'u32[]', space=smem, size = 0x4, offset = 0x4, fixed_abs, tag = 'smem constant byte address 0x4 - core index']
  #allocation1 [shape = 'u32[144,128]{1,0:T(1,128)}', space=vmem, size = 0x12000, scoped, tag = 'internal scratch']
  %s0 = inlined_call_operand.hbm [shape: f32[32,128], index: 0, kind: input, shape index: {}]
  %s1 = inlined_call_operand.hbm [shape: f32[3,32,128], index: 1, kind: output, shape index: {}]
  %s2 = sld [smem:[#allocation0]]
  $region18: #{mean_shift_forward.1} parent=0
    _
  %s4 = ssub.s32 1, %s2
  %s5 = scalar_select 0, %s4, %s2
  $region1: #{mean_shift_forward.1} parent=0
    #allocation2 [shape = 'u8[16384]{0}', space=vmem, size = 0x4000, scoped, tag = 'input window, operand 0, single buffered']
    #allocation3 [shape = 's32[1]{0}', space=sflag, size = 0x4, scoped, tag = 'scoped memory for mean_shift_forward.1']
    #allocation4 [shape = 's32[1]{0}', space=sflag, size = 0x4, scoped, tag = 'scoped memory for mean_shift_forward.1']
    #allocation5 [shape = 'u8[49152]{0}', space=vmem, size = 0xc000, scoped, tag = 'output window, operand 0, single buffered']
    %6 = vsyncpa [#allocation3], 0
    %7 = vsyncpa [#allocation4], 0
    // Predicated region
    $region2: #{mean_shift_forward.1} parent=1 // pred_check
      _
    $region3: #{mean_shift_forward.1} parent=1 // pred_check_branch
      %9 = sbr.rel (0) target = $region5
    $region4: #{mean_shift_forward.1} parent=1 // pred_region
      %s11 = ssub.s32 512, 512
      %12 = vsyncadd [#allocation3], %s11
      %s13 = sshll.u32 [#allocation2], 4
      %s14 = int_to_ptr.vmem [resolvable:$true] %s13
      %19 = dma.hbm_to_vmem [thread:$0]  %s0, 512, %s14, [#allocation3], 128, 128, 8
    $region5: #{mean_shift_forward.1} parent=1 // pred_fallthru
      _
    // Predicated region
    $region6: #{mean_shift_forward.1} parent=1 // pred_check
      _
    $region7: #{mean_shift_forward.1} parent=1 // pred_check_branch
      %21 = sbr.rel (0) target = $region9
    $region8: #{mean_shift_forward.1} parent=1 // pred_region
      %22 = dma.done [#allocation3], 512
    $region9: #{mean_shift_forward.1} parent=1 // pred_fallthru
      _
    %v23 = vld [vmem:[#allocation2] sm:$0xff]
    %v24 = vld [vmem:[#allocation2 + $0x8] sm:$0xff]
    %v25 = vld [vmem:[#allocation2 + $0x10] sm:$0xff]
    %v26 = vld [vmem:[#allocation2 + $0x18] sm:$0xff]
    %27 = vxpose.xlu0.b32.start [1/16] %v23, 128
    %28 = vxpose.xlu0.b32.cont [2/16] %v24, 128
    %29 = vxpose.xlu0.b32.cont [3/16] %v25, 128
    %30 = vxpose.xlu0.b32.cont [4/16] %v26, 128
    %31 = vxpose.xlu0.b32.cont [5/16] 0.0, 128
    %32 = vxpose.xlu0.b32.cont [6/16] 0.0, 128
    %33 = vxpose.xlu0.b32.cont [7/16] 0.0, 128
    %34 = vxpose.xlu0.b32.cont [8/16] 0.0, 128
    %35 = vxpose.xlu0.b32.cont [9/16] 0.0, 128
    %36 = vxpose.xlu0.b32.cont [10/16] 0.0, 128
    %37 = vxpose.xlu0.b32.cont [11/16] 0.0, 128
    %38 = vxpose.xlu0.b32.cont [12/16] 0.0, 128
    %39 = vxpose.xlu0.b32.cont [13/16] 0.0, 128
    %40 = vxpose.xlu0.b32.cont [14/16] 0.0, 128
    %41 = vxpose.xlu0.b32.cont [15/16] 0.0, 128
    %42 = vxpose.xlu0.b32.end [16/16] 0.0, 128
    %v43 = vpop.trf.xlu0
    %v44 = vpop.trf.xlu0
    %v45 = vpop.trf.xlu0
    %v46 = vpop.trf.xlu0
    %v47 = vpop.trf.xlu0
    %v48 = vpop.trf.xlu0
    %v49 = vpop.trf.xlu0
    %v50 = vpop.trf.xlu0
    %v51 = vpop.trf.xlu0
    %v52 = vpop.trf.xlu0
    %v53 = vpop.trf.xlu0
    %v54 = vpop.trf.xlu0
    %v55 = vpop.trf.xlu0
    %v56 = vpop.trf.xlu0
    %v57 = vpop.trf.xlu0
    %v58 = vpop.trf.xlu0
    %vm59 = vcmask 261120
    %v61 = vsel %vm59, %v43, 0
    %v64 = vsel %vm59, %v44, 0
    %v67 = vsel %vm59, %v45, 0
    %v70 = vsel %vm59, %v46, 0
    %v73 = vsel %vm59, %v47, 0
    %v76 = vsel %vm59, %v48, 0
    %v79 = vsel %vm59, %v49, 0
    %v82 = vsel %vm59, %v50, 0
    %v85 = vsel %vm59, %v51, 0
    %v88 = vsel %vm59, %v52, 0
    %v91 = vsel %vm59, %v53, 0
    %v94 = vsel %vm59, %v54, 0
    %v97 = vsel %vm59, %v55, 0
    %v100 = vsel %vm59, %v56, 0
    %v103 = vsel %vm59, %v57, 0
    %v106 = vsel %vm59, %v58, 0
    %108 = vmatprep.subr.mxu0 0.0
    %109 = vmatpush1.msra.mxu0 %v23
    %110 = vmatprep.subr.mxu0 0.0
    %111 = vmatpush1.msra.mxu0 %v24
    %112 = vmatprep.subr.mxu0 0.0
    %113 = vmatpush1.msra.mxu0 %v25
    %114 = vmatprep.subr.mxu0 0.0
    %115 = vmatpush1.msra.mxu0 %v26
    %116 = vmatprep.subr.mxu0 0.0
    %117 = vmatpush1.msra.mxu0 0.0
    %118 = vmatprep.subr.mxu0 0.0
    %119 = vmatpush1.msra.mxu0 0.0
    %120 = vmatprep.subr.mxu0 0.0
    %121 = vmatpush1.msra.mxu0 0.0
    %122 = vmatprep.subr.mxu0 0.0
    %123 = vmatpush1.msra.mxu0 0.0
    %124 = vmatprep.subr.mxu0 0.0
    %125 = vmatpush1.msra.mxu0 0.0
    %126 = vmatprep.subr.mxu0 0.0
    %127 = vmatpush1.msra.mxu0 0.0
    %128 = vmatprep.subr.mxu0 0.0
    %129 = vmatpush1.msra.mxu0 0.0
    %130 = vmatprep.subr.mxu0 0.0
    %131 = vmatpush1.msra.mxu0 0.0
    %132 = vmatprep.subr.mxu0 0.0
    %133 = vmatpush1.msra.mxu0 0.0
    %134 = vmatprep.subr.mxu0 0.0
    %135 = vmatpush1.msra.mxu0 0.0
    %136 = vmatprep.subr.mxu0 0.0
    %137 = vmatpush1.msra.mxu0 0.0
    %138 = vmatprep.subr.mxu0 0.0
    %139 = vmatpush1.msra.mxu0 0.0
    %140 = vmatprep.subr.mxu0 0.0
    %141 = vmatpush1.msra.mxu0 0.0
    %142 = vmatprep.subr.mxu0 0.0
    %143 = vmatpush1.msra.mxu0 0.0
    %144 = vmatprep.subr.mxu0 0.0
    %145 = vmatpush1.msra.mxu0 0.0
    %146 = vmatprep.subr.mxu0 0.0
    %147 = vmatpush1.msra.mxu0 0.0
    %148 = vmatprep.subr.mxu0 0.0
    %149 = vmatpush1.msra.mxu0 0.0
    %150 = vmatprep.subr.mxu0 0.0
    %151 = vmatpush1.msra.mxu0 0.0
    %152 = vmatprep.subr.mxu0 0.0
    %153 = vmatpush1.msra.mxu0 0.0
    %154 = vmatprep.subr.mxu0 0.0
    %155 = vmatpush1.msra.mxu0 0.0
    %156 = vmatprep.subr.mxu0 0.0
    %157 = vmatpush1.msra.mxu0 0.0
    %158 = vmatprep.subr.mxu0 0.0
    %159 = vmatpush1.msra.mxu0 0.0
    %160 = vmatprep.subr.mxu0 0.0
    %161 = vmatpush1.msra.mxu0 0.0
    %162 = vmatprep.subr.mxu0 0.0
    %163 = vmatpush1.msra.mxu0 0.0
    %164 = vmatprep.subr.mxu0 0.0
    %165 = vmatpush1.msra.mxu0 0.0
    %166 = vmatprep.subr.mxu0 0.0
    %167 = vmatpush1.msra.mxu0 0.0
    %168 = vmatprep.subr.mxu0 0.0
    %169 = vmatpush1.msra.mxu0 0.0
    %170 = vmatprep.subr.mxu0 0.0
    %171 = vmatpush1.msra.mxu0 0.0
    %172 = vmatprep.mubr.f32.mxu0 0.0
    %173 = vmatmul.mubr.f32.gmra.mrb[0].mxu0 %v61
    %v174 = vpop.f32.mrb[0].mxu0
    %v175 = vadd.f32 0.0, %v174
    %v176 = vpop.f32.mrb[0].mxu0
    %177 = vmatprep.mubr.f32.mxu0 0.0
    %178 = vmatmul.mubr.f32.gmra.mrb[0].mxu0 %v64
    %v179 = vpop.f32.mrb[0].mxu0
    %v180 = vadd.f32 0.0, %v179
    %v181 = vpop.f32.mrb[0].mxu0
    %182 = vmatprep.mubr.f32.mxu0 0.0
    %183 = vmatmul.mubr.f32.gmra.mrb[0].mxu0 %v67
    %v184 = vpop.f32.mrb[0].mxu0
    %v185 = vadd.f32 0.0, %v184
    %v186 = vpop.f32.mrb[0].mxu0
    %187 = vmatprep.mubr.f32.mxu0 0.0
    %188 = vmatmul.mubr.f32.gmra.mrb[0].mxu0 %v70
    %v189 = vpop.f32.mrb[0].mxu0
    %v190 = vadd.f32 0.0, %v189
    %v191 = vpop.f32.mrb[0].mxu0
    %192 = vmatprep.mubr.f32.mxu0 0.0
    %193 = vmatmul.mubr.f32.gmra.mrb[0].mxu0 %v73
    %v194 = vpop.f32.mrb[0].mxu0
    %v195 = vadd.f32 0.0, %v194
    %v196 = vpop.f32.mrb[0].mxu0
    %197 = vmatprep.mubr.f32.mxu0 0.0
    %198 = vmatmul.mubr.f32.gmra.mrb[0].mxu0 %v76
    %v199 = vpop.f32.mrb[0].mxu0
    %v200 = vadd.f32 0.0, %v199
    %v201 = vpop.f32.mrb[0].mxu0
    %202 = vmatprep.mubr.f32.mxu0 0.0
    %203 = vmatmul.mubr.f32.gmra.mrb[0].mxu0 %v79
    %v204 = vpop.f32.mrb[0].mxu0
    %v205 = vadd.f32 0.0, %v204
    %v206 = vpop.f32.mrb[0].mxu0
    %207 = vmatprep.mubr.f32.mxu0 0.0
    %208 = vmatmul.mubr.f32.gmra.mrb[0].mxu0 %v82
    %v209 = vpop.f32.mrb[0].mxu0
    %v210 = vadd.f32 0.0, %v209
    %v211 = vpop.f32.mrb[0].mxu0
    %212 = vmatprep.mubr.f32.mxu0 0.0
    %213 = vmatmul.mubr.f32.gmra.mrb[0].mxu0 %v85
    %v214 = vpop.f32.mrb[0].mxu0
    %v215 = vadd.f32 0.0, %v214
    %v216 = vpop.f32.mrb[0].mxu0
    %217 = vmatprep.mubr.f32.mxu0 0.0
    %218 = vmatmul.mubr.f32.gmra.mrb[0].mxu0 %v88
    %v219 = vpop.f32.mrb[0].mxu0
    %v220 = vadd.f32 0.0, %v219
    %v221 = vpop.f32.mrb[0].mxu0
    %222 = vmatprep.mubr.f32.mxu0 0.0
    %223 = vmatmul.mubr.f32.gmra.mrb[0].mxu0 %v91
    %v224 = vpop.f32.mrb[0].mxu0
    %v225 = vadd.f32 0.0, %v224
    %v226 = vpop.f32.mrb[0].mxu0
    %227 = vmatprep.mubr.f32.mxu0 0.0
    %228 = vmatmul.mubr.f32.gmra.mrb[0].mxu0 %v94
    %v229 = vpop.f32.mrb[0].mxu0
    %v230 = vadd.f32 0.0, %v229
    %v231 = vpop.f32.mrb[0].mxu0
    %232 = vmatprep.mubr.f32.mxu0 0.0
    %233 = vmatmul.mubr.f32.gmra.mrb[0].mxu0 %v97
    %v234 = vpop.f32.mrb[0].mxu0
    %v235 = vadd.f32 0.0, %v234
    %v236 = vpop.f32.mrb[0].mxu0
    %237 = vmatprep.mubr.f32.mxu0 0.0
    %238 = vmatmul.mubr.f32.gmra.mrb[0].mxu0 %v100
    %v239 = vpop.f32.mrb[0].mxu0
    %v240 = vadd.f32 0.0, %v239
    %v241 = vpop.f32.mrb[0].mxu0
    %242 = vmatprep.mubr.f32.mxu0 0.0
    %243 = vmatmul.mubr.f32.gmra.mrb[0].mxu0 %v103
    %v244 = vpop.f32.mrb[0].mxu0
    %v245 = vadd.f32 0.0, %v244
    %v246 = vpop.f32.mrb[0].mxu0
    %247 = vmatprep.mubr.f32.mxu0 0.0
    %248 = vmatmul.mubr.f32.gmra.mrb[0].mxu0 %v106
    %v249 = vpop.f32.mrb[0].mxu0
    %v250 = vadd.f32 0.0, %v249
    %v251 = vpop.f32.mrb[0].mxu0
    %252 = vdwg.mxu0
    %v253 = vmul.f32 %v175, 1.442695
    %v254 = vpow.pop %v253
    %v255 = vmul.f32 %v180, 1.442695
    %v256 = vpow.pop %v255
    %v257 = vmul.f32 %v185, 1.442695
    %v258 = vpow.pop %v257
    %v259 = vmul.f32 %v190, 1.442695
    %v260 = vpow.pop %v259
    %v261 = vmul.f32 %v195, 1.442695
    %v262 = vpow.pop %v261
    %v263 = vmul.f32 %v200, 1.442695
    %v264 = vpow.pop %v263
    %v265 = vmul.f32 %v205, 1.442695
    %v266 = vpow.pop %v265
    %v267 = vmul.f32 %v210, 1.442695
    %v268 = vpow.pop %v267
    %v269 = vmul.f32 %v215, 1.442695
    %v270 = vpow.pop %v269
    %v271 = vmul.f32 %v220, 1.442695
    %v272 = vpow.pop %v271
    %v273 = vmul.f32 %v225, 1.442695
    %v274 = vpow.pop %v273
    %v275 = vmul.f32 %v230, 1.442695
    %v276 = vpow.pop %v275
    %v277 = vmul.f32 %v235, 1.442695
    %v278 = vpow.pop %v277
    %v279 = vmul.f32 %v240, 1.442695
    %v280 = vpow.pop %v279
    %v281 = vmul.f32 %v245, 1.442695
    %v282 = vpow.pop %v281
    %v283 = vmul.f32 %v250, 1.442695
    %v284 = vpow.pop %v283
    %285 = vmatprep.subr.mxu0 0.0
    %286 = vmatpush1.msra.mxu0 %v254
    %287 = vmatprep.subr.mxu0 0.0
    %288 = vmatpush1.msra.mxu0 %v256
    %289 = vmatprep.subr.mxu0 0.0
    %290 = vmatpush1.msra.mxu0 %v258
    %291 = vmatprep.subr.mxu0 0.0
    %292 = vmatpush1.msra.mxu0 %v260
    %293 = vmatprep.subr.mxu0 0.0
    %294 = vmatpush1.msra.mxu0 %v262
    %295 = vmatprep.subr.mxu0 0.0
    %296 = vmatpush1.msra.mxu0 %v264
    %297 = vmatprep.subr.mxu0 0.0
    %298 = vmatpush1.msra.mxu0 %v266
    %299 = vmatprep.subr.mxu0 0.0
    %300 = vmatpush1.msra.mxu0 %v268
    %301 = vmatprep.subr.mxu0 0.0
    %302 = vmatpush1.msra.mxu0 %v270
    %303 = vmatprep.subr.mxu0 0.0
    %304 = vmatpush1.msra.mxu0 %v272
    %305 = vmatprep.subr.mxu0 0.0
    %306 = vmatpush1.msra.mxu0 %v274
    %307 = vmatprep.subr.mxu0 0.0
    %308 = vmatpush1.msra.mxu0 %v276
    %309 = vmatprep.subr.mxu0 0.0
    %310 = vmatpush1.msra.mxu0 %v278
    %311 = vmatprep.subr.mxu0 0.0
    %312 = vmatpush1.msra.mxu0 %v280
    %313 = vmatprep.subr.mxu0 0.0
    %314 = vmatpush1.msra.mxu0 %v282
    %315 = vmatprep.subr.mxu0 0.0
    %316 = vmatpush1.msra.mxu0 %v284
    %317 = vmatprep.subr.mxu0 0.0
    %318 = vmatpush1.msra.mxu0 0.0
    %319 = vmatprep.subr.mxu0 0.0
    %320 = vmatpush1.msra.mxu0 0.0
    %321 = vmatprep.subr.mxu0 0.0
    %322 = vmatpush1.msra.mxu0 0.0
    %323 = vmatprep.subr.mxu0 0.0
    %324 = vmatpush1.msra.mxu0 0.0
    %325 = vmatprep.subr.mxu0 0.0
    %326 = vmatpush1.msra.mxu0 0.0
    %327 = vmatprep.subr.mxu0 0.0
    %328 = vmatpush1.msra.mxu0 0.0
    %329 = vmatprep.subr.mxu0 0.0
    %330 = vmatpush1.msra.mxu0 0.0
    %331 = vmatprep.subr.mxu0 0.0
    %332 = vmatpush1.msra.mxu0 0.0
    %333 = vmatprep.subr.mxu0 0.0
    %334 = vmatpush1.msra.mxu0 0.0
    %335 = vmatprep.subr.mxu0 0.0
    %336 = vmatpush1.msra.mxu0 0.0
    %337 = vmatprep.subr.mxu0 0.0
    %338 = vmatpush1.msra.mxu0 0.0
    %339 = vmatprep.subr.mxu0 0.0
    %340 = vmatpush1.msra.mxu0 0.0
    %341 = vmatprep.subr.mxu0 0.0
    %342 = vmatpush1.msra.mxu0 0.0
    %343 = vmatprep.subr.mxu0 0.0
    %344 = vmatpush1.msra.mxu0 0.0
    %345 = vmatprep.subr.mxu0 0.0
    %346 = vmatpush1.msra.mxu0 0.0
    %347 = vmatprep.subr.mxu0 0.0
    %348 = vmatpush1.msra.mxu0 0.0
    %349 = vmatprep.mubr.f32.mxu0 0.0
    %350 = vmatmul.mubr.f32.gmra.mrb[0].mxu0 1.0
    %v351 = vpop.f32.mrb[0].mxu0
    %v352 = vadd.f32 0.0, %v351
    %v353 = vpop.f32.mrb[0].mxu0
    %354 = vdwg.mxu0
    %v355 = vrcp.pop %v352
    %v356 = vmul.f32 %v352, %v355
    %v357 = vsub.f32 2.0, %v356
    %v358 = vmul.f32 %v355, %v357
    %359 = vmatprep.subr.mxu0 0.0
    %360 = vmatpush1.msra.mxu0 %v254
    %361 = vmatprep.subr.mxu0 0.0
    %362 = vmatpush1.msra.mxu0 %v256
    %363 = vmatprep.subr.mxu0 0.0
    %364 = vmatpush1.msra.mxu0 %v258
    %365 = vmatprep.subr.mxu0 0.0
    %366 = vmatpush1.msra.mxu0 %v260
    %367 = vmatprep.subr.mxu0 0.0
    %368 = vmatpush1.msra.mxu0 %v262
    %369 = vmatprep.subr.mxu0 0.0
    %370 = vmatpush1.msra.mxu0 %v264
    %371 = vmatprep.subr.mxu0 0.0
    %372 = vmatpush1.msra.mxu0 %v266
    %373 = vmatprep.subr.mxu0 0.0
    %374 = vmatpush1.msra.mxu0 %v268
    %375 = vmatprep.subr.mxu0 0.0
    %376 = vmatpush1.msra.mxu0 %v270
    %377 = vmatprep.subr.mxu0 0.0
    %378 = vmatpush1.msra.mxu0 %v272
    %379 = vmatprep.subr.mxu0 0.0
    %380 = vmatpush1.msra.mxu0 %v274
    %381 = vmatprep.subr.mxu0 0.0
    %382 = vmatpush1.msra.mxu0 %v276
    %383 = vmatprep.subr.mxu0 0.0
    %384 = vmatpush1.msra.mxu0 %v278
    %385 = vmatprep.subr.mxu0 0.0
    %386 = vmatpush1.msra.mxu0 %v280
    %387 = vmatprep.subr.mxu0 0.0
    %388 = vmatpush1.msra.mxu0 %v282
    %389 = vmatprep.subr.mxu0 0.0
    %390 = vmatpush1.msra.mxu0 %v284
    %391 = vmatprep.subr.mxu0 0.0
    %392 = vmatpush1.msra.mxu0 0.0
    %393 = vmatprep.subr.mxu0 0.0
    %394 = vmatpush1.msra.mxu0 0.0
    %395 = vmatprep.subr.mxu0 0.0
    %396 = vmatpush1.msra.mxu0 0.0
    %397 = vmatprep.subr.mxu0 0.0
    %398 = vmatpush1.msra.mxu0 0.0
    %399 = vmatprep.subr.mxu0 0.0
    %400 = vmatpush1.msra.mxu0 0.0
    %401 = vmatprep.subr.mxu0 0.0
    %402 = vmatpush1.msra.mxu0 0.0
    %403 = vmatprep.subr.mxu0 0.0
    %404 = vmatpush1.msra.mxu0 0.0
    %405 = vmatprep.subr.mxu0 0.0
    %406 = vmatpush1.msra.mxu0 0.0
    %407 = vmatprep.subr.mxu0 0.0
    %408 = vmatpush1.msra.mxu0 0.0
    %409 = vmatprep.subr.mxu0 0.0
    %410 = vmatpush1.msra.mxu0 0.0
    %411 = vmatprep.subr.mxu0 0.0
    %412 = vmatpush1.msra.mxu0 0.0
    %413 = vmatprep.subr.mxu0 0.0
    %414 = vmatpush1.msra.mxu0 0.0
    %415 = vmatprep.subr.mxu0 0.0
    %416 = vmatpush1.msra.mxu0 0.0
    %417 = vmatprep.subr.mxu0 0.0
    %418 = vmatpush1.msra.mxu0 0.0
    %419 = vmatprep.subr.mxu0 0.0
    %420 = vmatpush1.msra.mxu0 0.0
    %421 = vmatprep.subr.mxu0 0.0
    %422 = vmatpush1.msra.mxu0 0.0
    %423 = vmatprep.mubr.f32.mxu0 0.0
    %424 = vmatmul.mubr.f32.gmra.mrb[0].mxu0 %v23
    %v425 = vpop.f32.mrb[0].mxu0
    %v426 = vadd.f32 0.0, %v425
    %v427 = vpop.f32.mrb[0].mxu0
    %428 = vmatprep.mubr.f32.mxu0 0.0
    %429 = vmatmul.mubr.f32.gmra.mrb[0].mxu0 %v24
    %v430 = vpop.f32.mrb[0].mxu0
    %v431 = vadd.f32 0.0, %v430
    %v432 = vpop.f32.mrb[0].mxu0
    %433 = vmatprep.mubr.f32.mxu0 0.0
    %434 = vmatmul.mubr.f32.gmra.mrb[0].mxu0 %v25
    %v435 = vpop.f32.mrb[0].mxu0
    %v436 = vadd.f32 0.0, %v435
    %v437 = vpop.f32.mrb[0].mxu0
    %438 = vmatprep.mubr.f32.mxu0 0.0
    %439 = vmatmul.mubr.f32.gmra.mrb[0].mxu0 %v26
    %v440 = vpop.f32.mrb[0].mxu0
    %v441 = vadd.f32 0.0, %v440
    %v442 = vpop.f32.mrb[0].mxu0
    %443 = vdwg.mxu0
    %v444 = vmul.f32 %v23, 0.5
    %v445 = vmul.f32 %v24, 0.5
    %v446 = vmul.f32 %v25, 0.5
    %v447 = vmul.f32 %v26, 0.5
    %v448 = vlaneseq
    %v449 = vshrl.u32 %v448, 7
    %v450 = vsub.s32 0, %v449
    %v451 = vrot.slane %v358, %v450
    %v452 = vmul.f32 %v426, %v451
    %v453 = vmul.f32 %v431, %v451
    %v454 = vmul.f32 %v436, %v451
    %v455 = vmul.f32 %v441, %v451
    %v456 = vmul.f32 %v452, 0.5
    %v457 = vmul.f32 %v453, 0.5
    %v458 = vmul.f32 %v454, 0.5
    %v459 = vmul.f32 %v455, 0.5
    %v460 = vadd.f32 %v444, %v456
    %v461 = vadd.f32 %v445, %v457
    %v462 = vadd.f32 %v446, %v458
    %v463 = vadd.f32 %v447, %v459
    %v464 = vmul.f32 %v460, %v460
    %v465 = vmul.f32 %v461, %v461
    %v466 = vmul.f32 %v462, %v462
    %v467 = vmul.f32 %v463, %v463
    %v468 = vadd.f32 %v464, %v465
    %v469 = vadd.f32 %v468, %v466
    %v470 = vadd.f32 %v469, %v467
    %v471 = vrot.slane %v470, 4
    %v472 = vadd.f32 %v470, %v471
    %v473 = vrot.slane %v472, 2
    %v474 = vadd.f32 %v472, %v473
    %v475 = vrot.slane %v474, 1
    %v476 = vadd.f32 %v474, %v475
    %v477 = vrsqrt.pop %v476
    %v478 = vmul.f32 %v460, %v477
    %v479 = vmul.f32 %v461, %v477
    %v480 = vmul.f32 %v462, %v477
    %v481 = vmul.f32 %v463, %v477
    %482 = vst [vmem:[#allocation5] sm:$0xff] %v478
    %483 = vst [vmem:[#allocation5 + $0x8] sm:$0xff] %v479
    %484 = vst [vmem:[#allocation5 + $0x10] sm:$0xff] %v480
    %485 = vst [vmem:[#allocation5 + $0x18] sm:$0xff] %v481
    %486 = vxpose.xlu0.b32.start [1/16] %v478, 128
    %487 = vxpose.xlu0.b32.cont [2/16] %v479, 128
    %488 = vxpose.xlu0.b32.cont [3/16] %v480, 128
    %489 = vxpose.xlu0.b32.cont [4/16] %v481, 128
    %490 = vxpose.xlu0.b32.cont [5/16] 0.0, 128
    %491 = vxpose.xlu0.b32.cont [6/16] 0.0, 128
    %492 = vxpose.xlu0.b32.cont [7/16] 0.0, 128
    %493 = vxpose.xlu0.b32.cont [8/16] 0.0, 128
    %494 = vxpose.xlu0.b32.cont [9/16] 0.0, 128
    %495 = vxpose.xlu0.b32.cont [10/16] 0.0, 128
    %496 = vxpose.xlu0.b32.cont [11/16] 0.0, 128
    %497 = vxpose.xlu0.b32.cont [12/16] 0.0, 128
    %498 = vxpose.xlu0.b32.cont [13/16] 0.0, 128
    %499 = vxpose.xlu0.b32.cont [14/16] 0.0, 128
    %500 = vxpose.xlu0.b32.cont [15/16] 0.0, 128
    %501 = vxpose.xlu0.b32.end [16/16] 0.0, 128
    %v502 = vpop.trf.xlu0
    %v503 = vpop.trf.xlu0
    %v504 = vpop.trf.xlu0
    %v505 = vpop.trf.xlu0
    %v506 = vpop.trf.xlu0
    %v507 = vpop.trf.xlu0
    %v508 = vpop.trf.xlu0
    %v509 = vpop.trf.xlu0
    %v510 = vpop.trf.xlu0
    %v511 = vpop.trf.xlu0
    %v512 = vpop.trf.xlu0
    %v513 = vpop.trf.xlu0
    %v514 = vpop.trf.xlu0
    %v515 = vpop.trf.xlu0
    %v516 = vpop.trf.xlu0
    %v517 = vpop.trf.xlu0
    %v519 = vsel %vm59, %v502, 0
    %v522 = vsel %vm59, %v503, 0
    %v525 = vsel %vm59, %v504, 0
    %v528 = vsel %vm59, %v505, 0
    %v531 = vsel %vm59, %v506, 0
    %v534 = vsel %vm59, %v507, 0
    %v537 = vsel %vm59, %v508, 0
    %v540 = vsel %vm59, %v509, 0
    %v543 = vsel %vm59, %v510, 0
    %v546 = vsel %vm59, %v511, 0
    %v549 = vsel %vm59, %v512, 0
    %v552 = vsel %vm59, %v513, 0
    %v555 = vsel %vm59, %v514, 0
    %v558 = vsel %vm59, %v515, 0
    %v561 = vsel %vm59, %v516, 0
    %v564 = vsel %vm59, %v517, 0
    %566 = vmatprep.subr.mxu0 0.0
    %567 = vmatpush1.msra.mxu0 %v478
    %568 = vmatprep.subr.mxu0 0.0
    %569 = vmatpush1.msra.mxu0 %v479
    %570 = vmatprep.subr.mxu0 0.0
    %571 = vmatpush1.msra.mxu0 %v480
    %572 = vmatprep.subr.mxu0 0.0
    %573 = vmatpush1.msra.mxu0 %v481
    %574 = vmatprep.subr.mxu0 0.0
    %575 = vmatpush1.msra.mxu0 0.0
    %576 = vmatprep.subr.mxu0 0.0
    %577 = vmatpush1.msra.mxu0 0.0
    %578 = vmatprep.subr.mxu0 0.0
    %579 = vmatpush1.msra.mxu0 0.0
    %580 = vmatprep.subr.mxu0 0.0
    %581 = vmatpush1.msra.mxu0 0.0
    %582 = vmatprep.subr.mxu0 0.0
    %583 = vmatpush1.msra.mxu0 0.0
    %584 = vmatprep.subr.mxu0 0.0
    %585 = vmatpush1.msra.mxu0 0.0
    %586 = vmatprep.subr.mxu0 0.0
    %587 = vmatpush1.msra.mxu0 0.0
    %588 = vmatprep.subr.mxu0 0.0
    %589 = vmatpush1.msra.mxu0 0.0
    %590 = vmatprep.subr.mxu0 0.0
    %591 = vmatpush1.msra.mxu0 0.0
    %592 = vmatprep.subr.mxu0 0.0
    %593 = vmatpush1.msra.mxu0 0.0
    %594 = vmatprep.subr.mxu0 0.0
    %595 = vmatpush1.msra.mxu0 0.0
    %596 = vmatprep.subr.mxu0 0.0
    %597 = vmatpush1.msra.mxu0 0.0
    %598 = vmatprep.subr.mxu0 0.0
    %599 = vmatpush1.msra.mxu0 0.0
    %600 = vmatprep.subr.mxu0 0.0
    %601 = vmatpush1.msra.mxu0 0.0
    %602 = vmatprep.subr.mxu0 0.0
    %603 = vmatpush1.msra.mxu0 0.0
    %604 = vmatprep.subr.mxu0 0.0
    %605 = vmatpush1.msra.mxu0 0.0
    %606 = vmatprep.subr.mxu0 0.0
    %607 = vmatpush1.msra.mxu0 0.0
    %608 = vmatprep.subr.mxu0 0.0
    %609 = vmatpush1.msra.mxu0 0.0
    %610 = vmatprep.subr.mxu0 0.0
    %611 = vmatpush1.msra.mxu0 0.0
    %612 = vmatprep.subr.mxu0 0.0
    %613 = vmatpush1.msra.mxu0 0.0
    %614 = vmatprep.subr.mxu0 0.0
    %615 = vmatpush1.msra.mxu0 0.0
    %616 = vmatprep.subr.mxu0 0.0
    %617 = vmatpush1.msra.mxu0 0.0
    %618 = vmatprep.subr.mxu0 0.0
    %619 = vmatpush1.msra.mxu0 0.0
    %620 = vmatprep.subr.mxu0 0.0
    %621 = vmatpush1.msra.mxu0 0.0
    %622 = vmatprep.subr.mxu0 0.0
    %623 = vmatpush1.msra.mxu0 0.0
    %624 = vmatprep.subr.mxu0 0.0
    %625 = vmatpush1.msra.mxu0 0.0
    %626 = vmatprep.subr.mxu0 0.0
    %627 = vmatpush1.msra.mxu0 0.0
    %628 = vmatprep.subr.mxu0 0.0
    %629 = vmatpush1.msra.mxu0 0.0
    %630 = vmatprep.mubr.f32.mxu0 0.0
    %631 = vmatmul.mubr.f32.gmra.mrb[0].mxu0 %v519
    %v632 = vpop.f32.mrb[0].mxu0
    %v633 = vadd.f32 0.0, %v632
    %v634 = vpop.f32.mrb[0].mxu0
    %635 = vmatprep.mubr.f32.mxu0 0.0
    %636 = vmatmul.mubr.f32.gmra.mrb[0].mxu0 %v522
    %v637 = vpop.f32.mrb[0].mxu0
    %v638 = vadd.f32 0.0, %v637
    %v639 = vpop.f32.mrb[0].mxu0
    %640 = vmatprep.mubr.f32.mxu0 0.0
    %641 = vmatmul.mubr.f32.gmra.mrb[0].mxu0 %v525
    %v642 = vpop.f32.mrb[0].mxu0
    %v643 = vadd.f32 0.0, %v642
    %v644 = vpop.f32.mrb[0].mxu0
    %645 = vmatprep.mubr.f32.mxu0 0.0
    %646 = vmatmul.mubr.f32.gmra.mrb[0].mxu0 %v528
    %v647 = vpop.f32.mrb[0].mxu0
    %v648 = vadd.f32 0.0, %v647
    %v649 = vpop.f32.mrb[0].mxu0
    %650 = vmatprep.mubr.f32.mxu0 0.0
    %651 = vmatmul.mubr.f32.gmra.mrb[0].mxu0 %v531
    %v652 = vpop.f32.mrb[0].mxu0
    %v653 = vadd.f32 0.0, %v652
    %v654 = vpop.f32.mrb[0].mxu0
    %655 = vmatprep.mubr.f32.mxu0 0.0
    %656 = vmatmul.mubr.f32.gmra.mrb[0].mxu0 %v534
    %v657 = vpop.f32.mrb[0].mxu0
    %v658 = vadd.f32 0.0, %v657
    %v659 = vpop.f32.mrb[0].mxu0
    %660 = vmatprep.mubr.f32.mxu0 0.0
    %661 = vmatmul.mubr.f32.gmra.mrb[0].mxu0 %v537
    %v662 = vpop.f32.mrb[0].mxu0
    %v663 = vadd.f32 0.0, %v662
    %v664 = vpop.f32.mrb[0].mxu0
    %665 = vmatprep.mubr.f32.mxu0 0.0
    %666 = vmatmul.mubr.f32.gmra.mrb[0].mxu0 %v540
    %v667 = vpop.f32.mrb[0].mxu0
    %v668 = vadd.f32 0.0, %v667
    %v669 = vpop.f32.mrb[0].mxu0
    %670 = vmatprep.mubr.f32.mxu0 0.0
    %671 = vmatmul.mubr.f32.gmra.mrb[0].mxu0 %v543
    %v672 = vpop.f32.mrb[0].mxu0
    %v673 = vadd.f32 0.0, %v672
    %v674 = vpop.f32.mrb[0].mxu0
    %675 = vmatprep.mubr.f32.mxu0 0.0
    %676 = vmatmul.mubr.f32.gmra.mrb[0].mxu0 %v546
    %v677 = vpop.f32.mrb[0].mxu0
    %v678 = vadd.f32 0.0, %v677
    %v679 = vpop.f32.mrb[0].mxu0
    %680 = vmatprep.mubr.f32.mxu0 0.0
    %681 = vmatmul.mubr.f32.gmra.mrb[0].mxu0 %v549
    %v682 = vpop.f32.mrb[0].mxu0
    %v683 = vadd.f32 0.0, %v682
    %v684 = vpop.f32.mrb[0].mxu0
    %685 = vmatprep.mubr.f32.mxu0 0.0
    %686 = vmatmul.mubr.f32.gmra.mrb[0].mxu0 %v552
    %v687 = vpop.f32.mrb[0].mxu0
    %v688 = vadd.f32 0.0, %v687
    %v689 = vpop.f32.mrb[0].mxu0
    %690 = vmatprep.mubr.f32.mxu0 0.0
    %691 = vmatmul.mubr.f32.gmra.mrb[0].mxu0 %v555
    %v692 = vpop.f32.mrb[0].mxu0
    %v693 = vadd.f32 0.0, %v692
    %v694 = vpop.f32.mrb[0].mxu0
    %695 = vmatprep.mubr.f32.mxu0 0.0
    %696 = vmatmul.mubr.f32.gmra.mrb[0].mxu0 %v558
    %v697 = vpop.f32.mrb[0].mxu0
    %v698 = vadd.f32 0.0, %v697
    %v699 = vpop.f32.mrb[0].mxu0
    %700 = vmatprep.mubr.f32.mxu0 0.0
    %701 = vmatmul.mubr.f32.gmra.mrb[0].mxu0 %v561
    %v702 = vpop.f32.mrb[0].mxu0
    %v703 = vadd.f32 0.0, %v702
    %v704 = vpop.f32.mrb[0].mxu0
    %705 = vmatprep.mubr.f32.mxu0 0.0
    %706 = vmatmul.mubr.f32.gmra.mrb[0].mxu0 %v564
    %v707 = vpop.f32.mrb[0].mxu0
    %v708 = vadd.f32 0.0, %v707
    %v709 = vpop.f32.mrb[0].mxu0
    %710 = vdwg.mxu0
    %v711 = vmul.f32 %v633, 1.442695
    %v712 = vpow.pop %v711
    %v713 = vmul.f32 %v638, 1.442695
    %v714 = vpow.pop %v713
    %v715 = vmul.f32 %v643, 1.442695
    %v716 = vpow.pop %v715
    %v717 = vmul.f32 %v648, 1.442695
    %v718 = vpow.pop %v717
    %v719 = vmul.f32 %v653, 1.442695
    %v720 = vpow.pop %v719
    %v721 = vmul.f32 %v658, 1.442695
    %v722 = vpow.pop %v721
    %v723 = vmul.f32 %v663, 1.442695
    %v724 = vpow.pop %v723
    %v725 = vmul.f32 %v668, 1.442695
    %v726 = vpow.pop %v725
    %v727 = vmul.f32 %v673, 1.442695
    %v728 = vpow.pop %v727
    %v729 = vmul.f32 %v678, 1.442695
    %v730 = vpow.pop %v729
    %v731 = vmul.f32 %v683, 1.442695
    %v732 = vpow.pop %v731
    %v733 = vmul.f32 %v688, 1.442695
    %v734 = vpow.pop %v733
    %v735 = vmul.f32 %v693, 1.442695
    %v736 = vpow.pop %v735
    %v737 = vmul.f32 %v698, 1.442695
    %v738 = vpow.pop %v737
    %v739 = vmul.f32 %v703, 1.442695
    %v740 = vpow.pop %v739
    %v741 = vmul.f32 %v708, 1.442695
    %v742 = vpow.pop %v741
    %743 = vmatprep.subr.mxu0 0.0
    %744 = vmatpush1.msra.mxu0 %v712
    %745 = vmatprep.subr.mxu0 0.0
    %746 = vmatpush1.msra.mxu0 %v714
    %747 = vmatprep.subr.mxu0 0.0
    %748 = vmatpush1.msra.mxu0 %v716
    %749 = vmatprep.subr.mxu0 0.0
    %750 = vmatpush1.msra.mxu0 %v718
    %751 = vmatprep.subr.mxu0 0.0
    %752 = vmatpush1.msra.mxu0 %v720
    %753 = vmatprep.subr.mxu0 0.0
    %754 = vmatpush1.msra.mxu0 %v722
    %755 = vmatprep.subr.mxu0 0.0
    %756 = vmatpush1.msra.mxu0 %v724
    %757 = vmatprep.subr.mxu0 0.0
    %758 = vmatpush1.msra.mxu0 %v726
    %759 = vmatprep.subr.mxu0 0.0
    %760 = vmatpush1.msra.mxu0 %v728
    %761 = vmatprep.subr.mxu0 0.0
    %762 = vmatpush1.msra.mxu0 %v730
    %763 = vmatprep.subr.mxu0 0.0
    %764 = vmatpush1.msra.mxu0 %v732
    %765 = vmatprep.subr.mxu0 0.0
    %766 = vmatpush1.msra.mxu0 %v734
    %767 = vmatprep.subr.mxu0 0.0
    %768 = vmatpush1.msra.mxu0 %v736
    %769 = vmatprep.subr.mxu0 0.0
    %770 = vmatpush1.msra.mxu0 %v738
    %771 = vmatprep.subr.mxu0 0.0
    %772 = vmatpush1.msra.mxu0 %v740
    %773 = vmatprep.subr.mxu0 0.0
    %774 = vmatpush1.msra.mxu0 %v742
    %775 = vmatprep.subr.mxu0 0.0
    %776 = vmatpush1.msra.mxu0 0.0
    %777 = vmatprep.subr.mxu0 0.0
    %778 = vmatpush1.msra.mxu0 0.0
    %779 = vmatprep.subr.mxu0 0.0
    %780 = vmatpush1.msra.mxu0 0.0
    %781 = vmatprep.subr.mxu0 0.0
    %782 = vmatpush1.msra.mxu0 0.0
    %783 = vmatprep.subr.mxu0 0.0
    %784 = vmatpush1.msra.mxu0 0.0
    %785 = vmatprep.subr.mxu0 0.0
    %786 = vmatpush1.msra.mxu0 0.0
    %787 = vmatprep.subr.mxu0 0.0
    %788 = vmatpush1.msra.mxu0 0.0
    %789 = vmatprep.subr.mxu0 0.0
    %790 = vmatpush1.msra.mxu0 0.0
    %791 = vmatprep.subr.mxu0 0.0
    %792 = vmatpush1.msra.mxu0 0.0
    %793 = vmatprep.subr.mxu0 0.0
    %794 = vmatpush1.msra.mxu0 0.0
    %795 = vmatprep.subr.mxu0 0.0
    %796 = vmatpush1.msra.mxu0 0.0
    %797 = vmatprep.subr.mxu0 0.0
    %798 = vmatpush1.msra.mxu0 0.0
    %799 = vmatprep.subr.mxu0 0.0
    %800 = vmatpush1.msra.mxu0 0.0
    %801 = vmatprep.subr.mxu0 0.0
    %802 = vmatpush1.msra.mxu0 0.0
    %803 = vmatprep.subr.mxu0 0.0
    %804 = vmatpush1.msra.mxu0 0.0
    %805 = vmatprep.subr.mxu0 0.0
    %806 = vmatpush1.msra.mxu0 0.0
    %807 = vmatprep.mubr.f32.mxu0 0.0
    %808 = vmatmul.mubr.f32.gmra.mrb[0].mxu0 1.0
    %v809 = vpop.f32.mrb[0].mxu0
    %v810 = vadd.f32 0.0, %v809
    %v811 = vpop.f32.mrb[0].mxu0
    %812 = vdwg.mxu0
    %v813 = vrcp.pop %v810
    %v814 = vmul.f32 %v810, %v813
    %v815 = vsub.f32 2.0, %v814
    %v816 = vmul.f32 %v813, %v815
    %817 = vmatprep.subr.mxu0 0.0
    %818 = vmatpush1.msra.mxu0 %v712
    %819 = vmatprep.subr.mxu0 0.0
    %820 = vmatpush1.msra.mxu0 %v714
    %821 = vmatprep.subr.mxu0 0.0
    %822 = vmatpush1.msra.mxu0 %v716
    %823 = vmatprep.subr.mxu0 0.0
    %824 = vmatpush1.msra.mxu0 %v718
    %825 = vmatprep.subr.mxu0 0.0
    %826 = vmatpush1.msra.mxu0 %v720
    %827 = vmatprep.subr.mxu0 0.0
    %828 = vmatpush1.msra.mxu0 %v722
    %829 = vmatprep.subr.mxu0 0.0
    %830 = vmatpush1.msra.mxu0 %v724
    %831 = vmatprep.subr.mxu0 0.0
    %832 = vmatpush1.msra.mxu0 %v726
    %833 = vmatprep.subr.mxu0 0.0
    %834 = vmatpush1.msra.mxu0 %v728
    %835 = vmatprep.subr.mxu0 0.0
    %836 = vmatpush1.msra.mxu0 %v730
    %837 = vmatprep.subr.mxu0 0.0
    %838 = vmatpush1.msra.mxu0 %v732
    %839 = vmatprep.subr.mxu0 0.0
    %840 = vmatpush1.msra.mxu0 %v734
    %841 = vmatprep.subr.mxu0 0.0
    %842 = vmatpush1.msra.mxu0 %v736
    %843 = vmatprep.subr.mxu0 0.0
    %844 = vmatpush1.msra.mxu0 %v738
    %845 = vmatprep.subr.mxu0 0.0
    %846 = vmatpush1.msra.mxu0 %v740
    %847 = vmatprep.subr.mxu0 0.0
    %848 = vmatpush1.msra.mxu0 %v742
    %849 = vmatprep.subr.mxu0 0.0
    %850 = vmatpush1.msra.mxu0 0.0
    %851 = vmatprep.subr.mxu0 0.0
    %852 = vmatpush1.msra.mxu0 0.0
    %853 = vmatprep.subr.mxu0 0.0
    %854 = vmatpush1.msra.mxu0 0.0
    %855 = vmatprep.subr.mxu0 0.0
    %856 = vmatpush1.msra.mxu0 0.0
    %857 = vmatprep.subr.mxu0 0.0
    %858 = vmatpush1.msra.mxu0 0.0
    %859 = vmatprep.subr.mxu0 0.0
    %860 = vmatpush1.msra.mxu0 0.0
    %861 = vmatprep.subr.mxu0 0.0
    %862 = vmatpush1.msra.mxu0 0.0
    %863 = vmatprep.subr.mxu0 0.0
    %864 = vmatpush1.msra.mxu0 0.0
    %865 = vmatprep.subr.mxu0 0.0
    %866 = vmatpush1.msra.mxu0 0.0
    %867 = vmatprep.subr.mxu0 0.0
    %868 = vmatpush1.msra.mxu0 0.0
    %869 = vmatprep.subr.mxu0 0.0
    %870 = vmatpush1.msra.mxu0 0.0
    %871 = vmatprep.subr.mxu0 0.0
    %872 = vmatpush1.msra.mxu0 0.0
    %873 = vmatprep.subr.mxu0 0.0
    %874 = vmatpush1.msra.mxu0 0.0
    %875 = vmatprep.subr.mxu0 0.0
    %876 = vmatpush1.msra.mxu0 0.0
    %877 = vmatprep.subr.mxu0 0.0
    %878 = vmatpush1.msra.mxu0 0.0
    %879 = vmatprep.subr.mxu0 0.0
    %880 = vmatpush1.msra.mxu0 0.0
    %881 = vmatprep.mubr.f32.mxu0 0.0
    %882 = vmatmul.mubr.f32.gmra.mrb[0].mxu0 %v478
    %v883 = vpop.f32.mrb[0].mxu0
    %v884 = vadd.f32 0.0, %v883
    %v885 = vpop.f32.mrb[0].mxu0
    %886 = vmatprep.mubr.f32.mxu0 0.0
    %887 = vmatmul.mubr.f32.gmra.mrb[0].mxu0 %v479
    %v888 = vpop.f32.mrb[0].mxu0
    %v889 = vadd.f32 0.0, %v888
    %v890 = vpop.f32.mrb[0].mxu0
    %891 = vmatprep.mubr.f32.mxu0 0.0
    %892 = vmatmul.mubr.f32.gmra.mrb[0].mxu0 %v480
    %v893 = vpop.f32.mrb[0].mxu0
    %v894 = vadd.f32 0.0, %v893
    %v895 = vpop.f32.mrb[0].mxu0
    %896 = vmatprep.mubr.f32.mxu0 0.0
    %897 = vmatmul.mubr.f32.gmra.mrb[0].mxu0 %v481
    %v898 = vpop.f32.mrb[0].mxu0
    %v899 = vadd.f32 0.0, %v898
    %v900 = vpop.f32.mrb[0].mxu0
    %901 = vdwg.mxu0
    %v902 = vmul.f32 %v478, 0.5
    %v903 = vmul.f32 %v479, 0.5
    %v904 = vmul.f32 %v480, 0.5
    %v905 = vmul.f32 %v481, 0.5
    %v906 = vlaneseq
    %v907 = vshrl.u32 %v906, 7
    %v908 = vsub.s32 0, %v907
    %v909 = vrot.slane %v816, %v908
    %v910 = vmul.f32 %v884, %v909
    %v911 = vmul.f32 %v889, %v909
    %v912 = vmul.f32 %v894, %v909
    %v913 = vmul.f32 %v899, %v909
    %v914 = vmul.f32 %v910, 0.5
    %v915 = vmul.f32 %v911, 0.5
    %v916 = vmul.f32 %v912, 0.5
    %v917 = vmul.f32 %v913, 0.5
    %v918 = vadd.f32 %v902, %v914
    %v919 = vadd.f32 %v903, %v915
    %v920 = vadd.f32 %v904, %v916
    %v921 = vadd.f32 %v905, %v917
    %v922 = vmul.f32 %v918, %v918
    %v923 = vmul.f32 %v919, %v919
    %v924 = vmul.f32 %v920, %v920
    %v925 = vmul.f32 %v921, %v921
    %v926 = vadd.f32 %v922, %v923
    %v927 = vadd.f32 %v926, %v924
    %v928 = vadd.f32 %v927, %v925
    %v929 = vrot.slane %v928, 4
    %v930 = vadd.f32 %v928, %v929
    %v931 = vrot.slane %v930, 2
    %v932 = vadd.f32 %v930, %v931
    %v933 = vrot.slane %v932, 1
    %v934 = vadd.f32 %v932, %v933
    %v935 = vrsqrt.pop %v934
    %v936 = vmul.f32 %v918, %v935
    %v937 = vmul.f32 %v919, %v935
    %v938 = vmul.f32 %v920, %v935
    %v939 = vmul.f32 %v921, %v935
    %s940 = scalar_lea.vmem [#allocation5], 32
    %941 = vst [vmem:[%s940] sm:$0xff] %v936
    %942 = vst [vmem:[%s940 + $0x8] sm:$0xff] %v937
    %943 = vst [vmem:[%s940 + $0x10] sm:$0xff] %v938
    %944 = vst [vmem:[%s940 + $0x18] sm:$0xff] %v939
    %945 = vxpose.xlu0.b32.start [1/16] %v936, 128
    %946 = vxpose.xlu0.b32.cont [2/16] %v937, 128
    %947 = vxpose.xlu0.b32.cont [3/16] %v938, 128
    %948 = vxpose.xlu0.b32.cont [4/16] %v939, 128
    %949 = vxpose.xlu0.b32.cont [5/16] 0.0, 128
    %950 = vxpose.xlu0.b32.cont [6/16] 0.0, 128
    %951 = vxpose.xlu0.b32.cont [7/16] 0.0, 128
    %952 = vxpose.xlu0.b32.cont [8/16] 0.0, 128
    %953 = vxpose.xlu0.b32.cont [9/16] 0.0, 128
    %954 = vxpose.xlu0.b32.cont [10/16] 0.0, 128
    %955 = vxpose.xlu0.b32.cont [11/16] 0.0, 128
    %956 = vxpose.xlu0.b32.cont [12/16] 0.0, 128
    %957 = vxpose.xlu0.b32.cont [13/16] 0.0, 128
    %958 = vxpose.xlu0.b32.cont [14/16] 0.0, 128
    %959 = vxpose.xlu0.b32.cont [15/16] 0.0, 128
    %960 = vxpose.xlu0.b32.end [16/16] 0.0, 128
    %v961 = vpop.trf.xlu0
    %v962 = vpop.trf.xlu0
    %v963 = vpop.trf.xlu0
    %v964 = vpop.trf.xlu0
    %v965 = vpop.trf.xlu0
    %v966 = vpop.trf.xlu0
    %v967 = vpop.trf.xlu0
    %v968 = vpop.trf.xlu0
    %v969 = vpop.trf.xlu0
    %v970 = vpop.trf.xlu0
    %v971 = vpop.trf.xlu0
    %v972 = vpop.trf.xlu0
    %v973 = vpop.trf.xlu0
    %v974 = vpop.trf.xlu0
    %v975 = vpop.trf.xlu0
    %v976 = vpop.trf.xlu0
    %v978 = vsel %vm59, %v961, 0
    %v981 = vsel %vm59, %v962, 0
    %v984 = vsel %vm59, %v963, 0
    %v987 = vsel %vm59, %v964, 0
    %v990 = vsel %vm59, %v965, 0
    %v993 = vsel %vm59, %v966, 0
    %v996 = vsel %vm59, %v967, 0
    %v999 = vsel %vm59, %v968, 0
    %v1002 = vsel %vm59, %v969, 0
    %v1005 = vsel %vm59, %v970, 0
    %v1008 = vsel %vm59, %v971, 0
    %v1011 = vsel %vm59, %v972, 0
    %v1014 = vsel %vm59, %v973, 0
    %v1017 = vsel %vm59, %v974, 0
    %v1020 = vsel %vm59, %v975, 0
    %v1023 = vsel %vm59, %v976, 0
    %1025 = vmatprep.subr.mxu0 0.0
    %1026 = vmatpush1.msra.mxu0 %v936
    %1027 = vmatprep.subr.mxu0 0.0
    %1028 = vmatpush1.msra.mxu0 %v937
    %1029 = vmatprep.subr.mxu0 0.0
    %1030 = vmatpush1.msra.mxu0 %v938
    %1031 = vmatprep.subr.mxu0 0.0
    %1032 = vmatpush1.msra.mxu0 %v939
    %1033 = vmatprep.subr.mxu0 0.0
    %1034 = vmatpush1.msra.mxu0 0.0
    %1035 = vmatprep.subr.mxu0 0.0
    %1036 = vmatpush1.msra.mxu0 0.0
    %1037 = vmatprep.subr.mxu0 0.0
    %1038 = vmatpush1.msra.mxu0 0.0
    %1039 = vmatprep.subr.mxu0 0.0
    %1040 = vmatpush1.msra.mxu0 0.0
    %1041 = vmatprep.subr.mxu0 0.0
    %1042 = vmatpush1.msra.mxu0 0.0
    %1043 = vmatprep.subr.mxu0 0.0
    %1044 = vmatpush1.msra.mxu0 0.0
    %1045 = vmatprep.subr.mxu0 0.0
    %1046 = vmatpush1.msra.mxu0 0.0
    %1047 = vmatprep.subr.mxu0 0.0
    %1048 = vmatpush1.msra.mxu0 0.0
    %1049 = vmatprep.subr.mxu0 0.0
    %1050 = vmatpush1.msra.mxu0 0.0
    %1051 = vmatprep.subr.mxu0 0.0
    %1052 = vmatpush1.msra.mxu0 0.0
    %1053 = vmatprep.subr.mxu0 0.0
    %1054 = vmatpush1.msra.mxu0 0.0
    %1055 = vmatprep.subr.mxu0 0.0
    %1056 = vmatpush1.msra.mxu0 0.0
    %1057 = vmatprep.subr.mxu0 0.0
    %1058 = vmatpush1.msra.mxu0 0.0
    %1059 = vmatprep.subr.mxu0 0.0
    %1060 = vmatpush1.msra.mxu0 0.0
    %1061 = vmatprep.subr.mxu0 0.0
    %1062 = vmatpush1.msra.mxu0 0.0
    %1063 = vmatprep.subr.mxu0 0.0
    %1064 = vmatpush1.msra.mxu0 0.0
    %1065 = vmatprep.subr.mxu0 0.0
    %1066 = vmatpush1.msra.mxu0 0.0
    %1067 = vmatprep.subr.mxu0 0.0
    %1068 = vmatpush1.msra.mxu0 0.0
    %1069 = vmatprep.subr.mxu0 0.0
    %1070 = vmatpush1.msra.mxu0 0.0
    %1071 = vmatprep.subr.mxu0 0.0
    %1072 = vmatpush1.msra.mxu0 0.0
    %1073 = vmatprep.subr.mxu0 0.0
    %1074 = vmatpush1.msra.mxu0 0.0
    %1075 = vmatprep.subr.mxu0 0.0
    %1076 = vmatpush1.msra.mxu0 0.0
    %1077 = vmatprep.subr.mxu0 0.0
    %1078 = vmatpush1.msra.mxu0 0.0
    %1079 = vmatprep.subr.mxu0 0.0
    %1080 = vmatpush1.msra.mxu0 0.0
    %1081 = vmatprep.subr.mxu0 0.0
    %1082 = vmatpush1.msra.mxu0 0.0
    %1083 = vmatprep.subr.mxu0 0.0
    %1084 = vmatpush1.msra.mxu0 0.0
    %1085 = vmatprep.subr.mxu0 0.0
    %1086 = vmatpush1.msra.mxu0 0.0
    %1087 = vmatprep.subr.mxu0 0.0
    %1088 = vmatpush1.msra.mxu0 0.0
    %1089 = vmatprep.mubr.f32.mxu0 0.0
    %1090 = vmatmul.mubr.f32.gmra.mrb[0].mxu0 %v978
    %v1091 = vpop.f32.mrb[0].mxu0
    %v1092 = vadd.f32 0.0, %v1091
    %v1093 = vpop.f32.mrb[0].mxu0
    %1094 = vmatprep.mubr.f32.mxu0 0.0
    %1095 = vmatmul.mubr.f32.gmra.mrb[0].mxu0 %v981
    %v1096 = vpop.f32.mrb[0].mxu0
    %v1097 = vadd.f32 0.0, %v1096
    %v1098 = vpop.f32.mrb[0].mxu0
    %1099 = vmatprep.mubr.f32.mxu0 0.0
    %1100 = vmatmul.mubr.f32.gmra.mrb[0].mxu0 %v984
    %v1101 = vpop.f32.mrb[0].mxu0
    %v1102 = vadd.f32 0.0, %v1101
    %v1103 = vpop.f32.mrb[0].mxu0
    %1104 = vmatprep.mubr.f32.mxu0 0.0
    %1105 = vmatmul.mubr.f32.gmra.mrb[0].mxu0 %v987
    %v1106 = vpop.f32.mrb[0].mxu0
    %v1107 = vadd.f32 0.0, %v1106
    %v1108 = vpop.f32.mrb[0].mxu0
    %1109 = vmatprep.mubr.f32.mxu0 0.0
    %1110 = vmatmul.mubr.f32.gmra.mrb[0].mxu0 %v990
    %v1111 = vpop.f32.mrb[0].mxu0
    %v1112 = vadd.f32 0.0, %v1111
    %v1113 = vpop.f32.mrb[0].mxu0
    %1114 = vmatprep.mubr.f32.mxu0 0.0
    %1115 = vmatmul.mubr.f32.gmra.mrb[0].mxu0 %v993
    %v1116 = vpop.f32.mrb[0].mxu0
    %v1117 = vadd.f32 0.0, %v1116
    %v1118 = vpop.f32.mrb[0].mxu0
    %1119 = vmatprep.mubr.f32.mxu0 0.0
    %1120 = vmatmul.mubr.f32.gmra.mrb[0].mxu0 %v996
    %v1121 = vpop.f32.mrb[0].mxu0
    %v1122 = vadd.f32 0.0, %v1121
    %v1123 = vpop.f32.mrb[0].mxu0
    %1124 = vmatprep.mubr.f32.mxu0 0.0
    %1125 = vmatmul.mubr.f32.gmra.mrb[0].mxu0 %v999
    %v1126 = vpop.f32.mrb[0].mxu0
    %v1127 = vadd.f32 0.0, %v1126
    %v1128 = vpop.f32.mrb[0].mxu0
    %1129 = vmatprep.mubr.f32.mxu0 0.0
    %1130 = vmatmul.mubr.f32.gmra.mrb[0].mxu0 %v1002
    %v1131 = vpop.f32.mrb[0].mxu0
    %v1132 = vadd.f32 0.0, %v1131
    %v1133 = vpop.f32.mrb[0].mxu0
    %1134 = vmatprep.mubr.f32.mxu0 0.0
    %1135 = vmatmul.mubr.f32.gmra.mrb[0].mxu0 %v1005
    %v1136 = vpop.f32.mrb[0].mxu0
    %v1137 = vadd.f32 0.0, %v1136
    %v1138 = vpop.f32.mrb[0].mxu0
    %1139 = vmatprep.mubr.f32.mxu0 0.0
    %1140 = vmatmul.mubr.f32.gmra.mrb[0].mxu0 %v1008
    %v1141 = vpop.f32.mrb[0].mxu0
    %v1142 = vadd.f32 0.0, %v1141
    %v1143 = vpop.f32.mrb[0].mxu0
    %1144 = vmatprep.mubr.f32.mxu0 0.0
    %1145 = vmatmul.mubr.f32.gmra.mrb[0].mxu0 %v1011
    %v1146 = vpop.f32.mrb[0].mxu0
    %v1147 = vadd.f32 0.0, %v1146
    %v1148 = vpop.f32.mrb[0].mxu0
    %1149 = vmatprep.mubr.f32.mxu0 0.0
    %1150 = vmatmul.mubr.f32.gmra.mrb[0].mxu0 %v1014
    %v1151 = vpop.f32.mrb[0].mxu0
    %v1152 = vadd.f32 0.0, %v1151
    %v1153 = vpop.f32.mrb[0].mxu0
    %1154 = vmatprep.mubr.f32.mxu0 0.0
    %1155 = vmatmul.mubr.f32.gmra.mrb[0].mxu0 %v1017
    %v1156 = vpop.f32.mrb[0].mxu0
    %v1157 = vadd.f32 0.0, %v1156
    %v1158 = vpop.f32.mrb[0].mxu0
    %1159 = vmatprep.mubr.f32.mxu0 0.0
    %1160 = vmatmul.mubr.f32.gmra.mrb[0].mxu0 %v1020
    %v1161 = vpop.f32.mrb[0].mxu0
    %v1162 = vadd.f32 0.0, %v1161
    %v1163 = vpop.f32.mrb[0].mxu0
    %1164 = vmatprep.mubr.f32.mxu0 0.0
    %1165 = vmatmul.mubr.f32.gmra.mrb[0].mxu0 %v1023
    %v1166 = vpop.f32.mrb[0].mxu0
    %v1167 = vadd.f32 0.0, %v1166
    %v1168 = vpop.f32.mrb[0].mxu0
    %1169 = vdwg.mxu0
    %v1170 = vmul.f32 %v1092, 1.442695
    %v1171 = vpow.pop %v1170
    %v1172 = vmul.f32 %v1097, 1.442695
    %v1173 = vpow.pop %v1172
    %v1174 = vmul.f32 %v1102, 1.442695
    %v1175 = vpow.pop %v1174
    %v1176 = vmul.f32 %v1107, 1.442695
    %v1177 = vpow.pop %v1176
    %v1178 = vmul.f32 %v1112, 1.442695
    %v1179 = vpow.pop %v1178
    %v1180 = vmul.f32 %v1117, 1.442695
    %v1181 = vpow.pop %v1180
    %v1182 = vmul.f32 %v1122, 1.442695
    %v1183 = vpow.pop %v1182
    %v1184 = vmul.f32 %v1127, 1.442695
    %v1185 = vpow.pop %v1184
    %v1186 = vmul.f32 %v1132, 1.442695
    %v1187 = vpow.pop %v1186
    %v1188 = vmul.f32 %v1137, 1.442695
    %v1189 = vpow.pop %v1188
    %v1190 = vmul.f32 %v1142, 1.442695
    %v1191 = vpow.pop %v1190
    %v1192 = vmul.f32 %v1147, 1.442695
    %v1193 = vpow.pop %v1192
    %v1194 = vmul.f32 %v1152, 1.442695
    %v1195 = vpow.pop %v1194
    %v1196 = vmul.f32 %v1157, 1.442695
    %v1197 = vpow.pop %v1196
    %v1198 = vmul.f32 %v1162, 1.442695
    %v1199 = vpow.pop %v1198
    %v1200 = vmul.f32 %v1167, 1.442695
    %v1201 = vpow.pop %v1200
    %1202 = vmatprep.subr.mxu0 0.0
    %1203 = vmatpush1.msra.mxu0 %v1171
    %1204 = vmatprep.subr.mxu0 0.0
    %1205 = vmatpush1.msra.mxu0 %v1173
    %1206 = vmatprep.subr.mxu0 0.0
    %1207 = vmatpush1.msra.mxu0 %v1175
    %1208 = vmatprep.subr.mxu0 0.0
    %1209 = vmatpush1.msra.mxu0 %v1177
    %1210 = vmatprep.subr.mxu0 0.0
    %1211 = vmatpush1.msra.mxu0 %v1179
    %1212 = vmatprep.subr.mxu0 0.0
    %1213 = vmatpush1.msra.mxu0 %v1181
    %1214 = vmatprep.subr.mxu0 0.0
    %1215 = vmatpush1.msra.mxu0 %v1183
    %1216 = vmatprep.subr.mxu0 0.0
    %1217 = vmatpush1.msra.mxu0 %v1185
    %1218 = vmatprep.subr.mxu0 0.0
    %1219 = vmatpush1.msra.mxu0 %v1187
    %1220 = vmatprep.subr.mxu0 0.0
    %1221 = vmatpush1.msra.mxu0 %v1189
    %1222 = vmatprep.subr.mxu0 0.0
    %1223 = vmatpush1.msra.mxu0 %v1191
    %1224 = vmatprep.subr.mxu0 0.0
    %1225 = vmatpush1.msra.mxu0 %v1193
    %1226 = vmatprep.subr.mxu0 0.0
    %1227 = vmatpush1.msra.mxu0 %v1195
    %1228 = vmatprep.subr.mxu0 0.0
    %1229 = vmatpush1.msra.mxu0 %v1197
    %1230 = vmatprep.subr.mxu0 0.0
    %1231 = vmatpush1.msra.mxu0 %v1199
    %1232 = vmatprep.subr.mxu0 0.0
    %1233 = vmatpush1.msra.mxu0 %v1201
    %1234 = vmatprep.subr.mxu0 0.0
    %1235 = vmatpush1.msra.mxu0 0.0
    %1236 = vmatprep.subr.mxu0 0.0
    %1237 = vmatpush1.msra.mxu0 0.0
    %1238 = vmatprep.subr.mxu0 0.0
    %1239 = vmatpush1.msra.mxu0 0.0
    %1240 = vmatprep.subr.mxu0 0.0
    %1241 = vmatpush1.msra.mxu0 0.0
    %1242 = vmatprep.subr.mxu0 0.0
    %1243 = vmatpush1.msra.mxu0 0.0
    %1244 = vmatprep.subr.mxu0 0.0
    %1245 = vmatpush1.msra.mxu0 0.0
    %1246 = vmatprep.subr.mxu0 0.0
    %1247 = vmatpush1.msra.mxu0 0.0
    %1248 = vmatprep.subr.mxu0 0.0
    %1249 = vmatpush1.msra.mxu0 0.0
    %1250 = vmatprep.subr.mxu0 0.0
    %1251 = vmatpush1.msra.mxu0 0.0
    %1252 = vmatprep.subr.mxu0 0.0
    %1253 = vmatpush1.msra.mxu0 0.0
    %1254 = vmatprep.subr.mxu0 0.0
    %1255 = vmatpush1.msra.mxu0 0.0
    %1256 = vmatprep.subr.mxu0 0.0
    %1257 = vmatpush1.msra.mxu0 0.0
    %1258 = vmatprep.subr.mxu0 0.0
    %1259 = vmatpush1.msra.mxu0 0.0
    %1260 = vmatprep.subr.mxu0 0.0
    %1261 = vmatpush1.msra.mxu0 0.0
    %1262 = vmatprep.subr.mxu0 0.0
    %1263 = vmatpush1.msra.mxu0 0.0
    %1264 = vmatprep.subr.mxu0 0.0
    %1265 = vmatpush1.msra.mxu0 0.0
    %1266 = vmatprep.mubr.f32.mxu0 0.0
    %1267 = vmatmul.mubr.f32.gmra.mrb[0].mxu0 1.0
    %v1268 = vpop.f32.mrb[0].mxu0
    %v1269 = vadd.f32 0.0, %v1268
    %v1270 = vpop.f32.mrb[0].mxu0
    %1271 = vdwg.mxu0
    %v1272 = vrcp.pop %v1269
    %v1273 = vmul.f32 %v1269, %v1272
    %v1274 = vsub.f32 2.0, %v1273
    %v1275 = vmul.f32 %v1272, %v1274
    %1276 = vmatprep.subr.mxu0 0.0
    %1277 = vmatpush1.msra.mxu0 %v1171
    %1278 = vmatprep.subr.mxu0 0.0
    %1279 = vmatpush1.msra.mxu0 %v1173
    %1280 = vmatprep.subr.mxu0 0.0
    %1281 = vmatpush1.msra.mxu0 %v1175
    %1282 = vmatprep.subr.mxu0 0.0
    %1283 = vmatpush1.msra.mxu0 %v1177
    %1284 = vmatprep.subr.mxu0 0.0
    %1285 = vmatpush1.msra.mxu0 %v1179
    %1286 = vmatprep.subr.mxu0 0.0
    %1287 = vmatpush1.msra.mxu0 %v1181
    %1288 = vmatprep.subr.mxu0 0.0
    %1289 = vmatpush1.msra.mxu0 %v1183
    %1290 = vmatprep.subr.mxu0 0.0
    %1291 = vmatpush1.msra.mxu0 %v1185
    %1292 = vmatprep.subr.mxu0 0.0
    %1293 = vmatpush1.msra.mxu0 %v1187
    %1294 = vmatprep.subr.mxu0 0.0
    %1295 = vmatpush1.msra.mxu0 %v1189
    %1296 = vmatprep.subr.mxu0 0.0
    %1297 = vmatpush1.msra.mxu0 %v1191
    %1298 = vmatprep.subr.mxu0 0.0
    %1299 = vmatpush1.msra.mxu0 %v1193
    %1300 = vmatprep.subr.mxu0 0.0
    %1301 = vmatpush1.msra.mxu0 %v1195
    %1302 = vmatprep.subr.mxu0 0.0
    %1303 = vmatpush1.msra.mxu0 %v1197
    %1304 = vmatprep.subr.mxu0 0.0
    %1305 = vmatpush1.msra.mxu0 %v1199
    %1306 = vmatprep.subr.mxu0 0.0
    %1307 = vmatpush1.msra.mxu0 %v1201
    %1308 = vmatprep.subr.mxu0 0.0
    %1309 = vmatpush1.msra.mxu0 0.0
    %1310 = vmatprep.subr.mxu0 0.0
    %1311 = vmatpush1.msra.mxu0 0.0
    %1312 = vmatprep.subr.mxu0 0.0
    %1313 = vmatpush1.msra.mxu0 0.0
    %1314 = vmatprep.subr.mxu0 0.0
    %1315 = vmatpush1.msra.mxu0 0.0
    %1316 = vmatprep.subr.mxu0 0.0
    %1317 = vmatpush1.msra.mxu0 0.0
    %1318 = vmatprep.subr.mxu0 0.0
    %1319 = vmatpush1.msra.mxu0 0.0
    %1320 = vmatprep.subr.mxu0 0.0
    %1321 = vmatpush1.msra.mxu0 0.0
    %1322 = vmatprep.subr.mxu0 0.0
    %1323 = vmatpush1.msra.mxu0 0.0
    %1324 = vmatprep.subr.mxu0 0.0
    %1325 = vmatpush1.msra.mxu0 0.0
    %1326 = vmatprep.subr.mxu0 0.0
    %1327 = vmatpush1.msra.mxu0 0.0
    %1328 = vmatprep.subr.mxu0 0.0
    %1329 = vmatpush1.msra.mxu0 0.0
    %1330 = vmatprep.subr.mxu0 0.0
    %1331 = vmatpush1.msra.mxu0 0.0
    %1332 = vmatprep.subr.mxu0 0.0
    %1333 = vmatpush1.msra.mxu0 0.0
    %1334 = vmatprep.subr.mxu0 0.0
    %1335 = vmatpush1.msra.mxu0 0.0
    %1336 = vmatprep.subr.mxu0 0.0
    %1337 = vmatpush1.msra.mxu0 0.0
    %1338 = vmatprep.subr.mxu0 0.0
    %1339 = vmatpush1.msra.mxu0 0.0
    %1340 = vmatprep.mubr.f32.mxu0 0.0
    %1341 = vmatmul.mubr.f32.gmra.mrb[0].mxu0 %v936
    %v1342 = vpop.f32.mrb[0].mxu0
    %v1343 = vadd.f32 0.0, %v1342
    %v1344 = vpop.f32.mrb[0].mxu0
    %1345 = vmatprep.mubr.f32.mxu0 0.0
    %1346 = vmatmul.mubr.f32.gmra.mrb[0].mxu0 %v937
    %v1347 = vpop.f32.mrb[0].mxu0
    %v1348 = vadd.f32 0.0, %v1347
    %v1349 = vpop.f32.mrb[0].mxu0
    %1350 = vmatprep.mubr.f32.mxu0 0.0
    %1351 = vmatmul.mubr.f32.gmra.mrb[0].mxu0 %v938
    %v1352 = vpop.f32.mrb[0].mxu0
    %v1353 = vadd.f32 0.0, %v1352
    %v1354 = vpop.f32.mrb[0].mxu0
    %1355 = vmatprep.mubr.f32.mxu0 0.0
    %1356 = vmatmul.mubr.f32.gmra.mrb[0].mxu0 %v939
    %v1357 = vpop.f32.mrb[0].mxu0
    %v1358 = vadd.f32 0.0, %v1357
    %v1359 = vpop.f32.mrb[0].mxu0
    %1360 = vdwg.mxu0
    %v1361 = vmul.f32 %v936, 0.5
    %v1362 = vmul.f32 %v937, 0.5
    %v1363 = vmul.f32 %v938, 0.5
    %v1364 = vmul.f32 %v939, 0.5
    %v1365 = vlaneseq
    %v1366 = vshrl.u32 %v1365, 7
    %v1367 = vsub.s32 0, %v1366
    %v1368 = vrot.slane %v1275, %v1367
    %v1369 = vmul.f32 %v1343, %v1368
    %v1370 = vmul.f32 %v1348, %v1368
    %v1371 = vmul.f32 %v1353, %v1368
    %v1372 = vmul.f32 %v1358, %v1368
    %v1373 = vmul.f32 %v1369, 0.5
    %v1374 = vmul.f32 %v1370, 0.5
    %v1375 = vmul.f32 %v1371, 0.5
    %v1376 = vmul.f32 %v1372, 0.5
    %v1377 = vadd.f32 %v1361, %v1373
    %v1378 = vadd.f32 %v1362, %v1374
    %v1379 = vadd.f32 %v1363, %v1375
    %v1380 = vadd.f32 %v1364, %v1376
    %v1381 = vmul.f32 %v1377, %v1377
    %v1382 = vmul.f32 %v1378, %v1378
    %v1383 = vmul.f32 %v1379, %v1379
    %v1384 = vmul.f32 %v1380, %v1380
    %v1385 = vadd.f32 %v1381, %v1382
    %v1386 = vadd.f32 %v1385, %v1383
    %v1387 = vadd.f32 %v1386, %v1384
    %v1388 = vrot.slane %v1387, 4
    %v1389 = vadd.f32 %v1387, %v1388
    %v1390 = vrot.slane %v1389, 2
    %v1391 = vadd.f32 %v1389, %v1390
    %v1392 = vrot.slane %v1391, 1
    %v1393 = vadd.f32 %v1391, %v1392
    %v1394 = vrsqrt.pop %v1393
    %v1395 = vmul.f32 %v1377, %v1394
    %v1396 = vmul.f32 %v1378, %v1394
    %v1397 = vmul.f32 %v1379, %v1394
    %v1398 = vmul.f32 %v1380, %v1394
    %s1399 = scalar_lea.vmem [#allocation5], 64
    %1400 = vst [vmem:[%s1399] sm:$0xff] %v1395
    %1401 = vst [vmem:[%s1399 + $0x8] sm:$0xff] %v1396
    %1402 = vst [vmem:[%s1399 + $0x10] sm:$0xff] %v1397
    %1403 = vst [vmem:[%s1399 + $0x18] sm:$0xff] %v1398
    // Predicated region
    $region10: #{mean_shift_forward.1} parent=1 // pred_check
      _
    $region11: #{mean_shift_forward.1} parent=1 // pred_check_branch
      %1405 = sbr.rel (0) target = $region13
    $region12: #{mean_shift_forward.1} parent=1 // pred_region
      %s1407 = ssub.s32 1536, 1536
      %1408 = vsyncadd [#allocation4], %s1407
      %s1409 = sshll.u32 [#allocation5], 4
      %s1410 = int_to_ptr.vmem [resolvable:$true] %s1409
      %1415 = dma.vmem_to_hbm [thread:$0]  %s1410, 1536, %s1, [#allocation4], 128, 128, 8
    $region13: #{mean_shift_forward.1} parent=1 // pred_fallthru
      _
    // Predicated region
    $region14: #{mean_shift_forward.1} parent=1 // pred_check
      _
    $region15: #{mean_shift_forward.1} parent=1 // pred_check_branch
      %1417 = sbr.rel (0) target = $region17
    $region16: #{mean_shift_forward.1} parent=1 // pred_region
      %1418 = dma.done [#allocation4], 1536
    $region17: #{mean_shift_forward.1} parent=1 // pred_fallthru
      _
    %1419 = vsyncpa [#allocation3], 1
    %1420 = vsyncpa [#allocation4], 1

</llo_original>
